<compile_context>
chip_gen: v5e
topology: v5e:2x2
jax: 0.10.0
libtpu: 0.0.40
codegen_flags: <defaults>
</compile_context>

<pallas_src>
import functools

import jax
import jax.numpy as jnp
from jax import lax
from jax.experimental import pallas as pl
from jax.experimental.pallas import tpu as pltpu


def _self_attention_kernel(x_ref, w_ref, b_ref, o_ref, *, qpad):
    """One grid step processes a single (C, HW) image.

    x_ref : (C, HW)  f32   input image (residual path stays f32)
    w_ref : (Co, C)  bf16  stacked [Wq_pad; Wk_pad; gamma*Wv], Co = 2*qpad + C
    b_ref : (Co, 1)  f32   stacked [bq_pad; bk_pad; gamma*bv]
    o_ref : (C, HW)  f32   output image
    """
    x = x_ref[...]                                       # (C, HW) f32
    x_bf = x.astype(jnp.bfloat16)

    # Fused q/k/v projection: one MXU matmul, f32 accumulation, then bias.
    proj = lax.dot_general(
        w_ref[...], x_bf,
        dimension_numbers=(((1,), (0,)), ((), ())),
        preferred_element_type=jnp.float32) + b_ref[...]   # (Co, HW)

    # 8-sublane-aligned partitions (padding rows are exactly zero).
    q = proj[:qpad, :]                                    # (qpad, HW)
    k = proj[qpad:2 * qpad, :]                            # (qpad, HW)
    v = proj[2 * qpad:, :]                                # (C,    HW)  gamma folded in

    # scores[i, j] = sum_c q[c, i] * k[c, j]  -- no explicit transpose.
    scores = lax.dot_general(
        q.astype(jnp.bfloat16), k.astype(jnp.bfloat16),
        dimension_numbers=(((0,), (0,)), ((), ())),
        preferred_element_type=jnp.float32)               # (HW, HW)

    # Numerically-stable exp in f32 (row max on XLU is unavoidable).
    scores = scores - jnp.max(scores, axis=-1, keepdims=True)
    e = jnp.exp(scores)
    e_bf = e.astype(jnp.bfloat16)

    # Row sums of e in LANE orientation via a ones-row MXU matmul:
    # l_row[0, i] = sum_j e[i, j]  -> broadcasts over the C sublanes below.
    ones_row = jnp.ones((1, e_bf.shape[-1]), jnp.bfloat16)
    l_row = lax.dot_general(
        ones_row, e_bf,
        dimension_numbers=(((1,), (1,)), ((), ())),
        preferred_element_type=jnp.float32)               # (1, HW)

    # Unnormalized output: out_un[c, i] = sum_j v[c, j] * e[i, j].
    out_un = lax.dot_general(
        v.astype(jnp.bfloat16), e_bf,
        dimension_numbers=(((1,), (1,)), ((), ())),
        preferred_element_type=jnp.float32)               # (C, HW)

    # Deferred softmax normalization (C*HW multiplies instead of HW*HW),
    # reciprocal on the otherwise-idle EUP slot; gamma already baked in.
    out = out_un * pl.reciprocal(l_row, approx=True)

    o_ref[...] = (out + x).astype(o_ref.dtype)


def self_attention(x_nchw, wq, bq, wk, bk, wv, bv, gamma):
    """x_nchw: [B, C, H, W] float32. Returns [B, C, H, W]."""
    B, C, H, W = x_nchw.shape
    HW = H * W
    Cq = wq.shape[0]

    # Sublane-align the q/k partitions of the stacked projection.
    qpad = ((Cq + 7) // 8) * 8
    Co = 2 * qpad + C

    g = jnp.asarray(gamma, jnp.float32).reshape(())

    def pad_rows(w, b, rows):
        wp = jnp.zeros((rows, C), w.dtype).at[:w.shape[0]].set(w)
        bp = jnp.zeros((rows,), b.dtype).at[:b.shape[0]].set(b)
        return wp, bp

    wq_p, bq_p = pad_rows(wq, bq, qpad)
    wk_p, bk_p = pad_rows(wk, bk, qpad)

    # Stack & fuse: [Wq_pad; Wk_pad; gamma*Wv] in bf16 (MXU operands),
    # biases in f32.  Zero-padded q/k rows contribute 0 to the scores.
    w_all = jnp.concatenate([wq_p, wk_p, g * wv], axis=0).astype(jnp.bfloat16)   # (Co, C)
    b_all = jnp.concatenate([bq_p, bk_p, g * bv], axis=0).reshape(Co, 1)
    b_all = b_all.astype(jnp.float32)

    x = x_nchw.reshape(B, C, HW)

    kernel = functools.partial(_self_attention_kernel, qpad=qpad)
    full = lambda b: (0, 0)

    # Per-step VMEM (f32): 2x double-buffered (C,HW) in/out blocks
    # + (Co,HW) proj + ~2x (HW,HW) scores/e + (C,HW) out + tiny weights/bias.
    # ~2 MiB at (C=16, HW=256); 32 MiB leaves ample headroom and is within
    # physical VMEM on v5e (128 MiB) / v6e (128 MiB) / v7x (64 MiB).
    out = pl.pallas_call(
        kernel,
        out_shape=jax.ShapeDtypeStruct((B, C, HW), x.dtype),
        grid_spec=pltpu.PrefetchScalarGridSpec(
            num_scalar_prefetch=0,
            grid=(B,),                                     # one image per step
            in_specs=[
                pl.BlockSpec((None, C, HW), lambda b: (b, 0, 0)),  # x image (batch squeezed)
                pl.BlockSpec((Co, C), full),                       # fused weights (grid-invariant)
                pl.BlockSpec((Co, 1), full),                       # fused biases  (grid-invariant)
            ],
            out_specs=pl.BlockSpec((None, C, HW), lambda b: (b, 0, 0)),
        ),
        compiler_params=pltpu.CompilerParams(
            dimension_semantics=("parallel",),             # megacore-shard batch on v7x
            vmem_limit_bytes=32 * 1024 * 1024),
    )(x, w_all, b_all)

    return out.reshape(B, C, H, W)


def reference(x, wq, bq, wk, bk, wv, bv, gamma):
    """Pure-JAX reference mirroring the PyTorch SelfAttention.forward."""
    B, C, H, W = x.shape
    HW = H * W
    xf = x.reshape(B, C, HW)
    q = jnp.einsum('oc,bcn->bon', wq, xf) + bq[None, :, None]   # [B, Cq, HW]
    k = jnp.einsum('oc,bcn->bon', wk, xf) + bk[None, :, None]   # [B, Cq, HW]
    v = jnp.einsum('oc,bcn->bon', wv, xf) + bv[None, :, None]   # [B, C, HW]
    qT = jnp.transpose(q, (0, 2, 1))                            # [B, HW, Cq]
    attn = jax.nn.softmax(jnp.einsum('bnc,bcm->bnm', qT, k), axis=-1)
    out = jnp.einsum('bcm,bnm->bcn', v, attn).reshape(B, C, H, W)
    return gamma * out + x


if __name__ == "__main__":
    key = jax.random.PRNGKey(0)
    # Small shapes consistent with the module; H*W = 256 keeps blocks
    # lane-dense (multiple of 128). C must be a multiple of 8 (C // 8 heads).
    B, C, H, W = 2, 16, 16, 16
    Cq = C // 8

    k0, k1, k2, k3, k4, k5, k6 = jax.random.split(key, 7)
    x = jax.random.normal(k0, (B, C, H, W), dtype=jnp.float32)
    # nn.Conv2d(C, Cq, 1): weight [Cq, C] (1x1 kernel squeezed) + bias [Cq].
    wq = jax.random.normal(k1, (Cq, C), dtype=jnp.float32) * 0.1
    bq = jax.random.normal(k2, (Cq,), dtype=jnp.float32) * 0.1
    wk = jax.random.normal(k3, (Cq, C), dtype=jnp.float32) * 0.1
    bk = jax.random.normal(k4, (Cq,), dtype=jnp.float32) * 0.1
    wv = jax.random.normal(k5, (C, C), dtype=jnp.float32) * 0.1
    bv = jax.random.normal(k6, (C,), dtype=jnp.float32) * 0.1
    # nn.Parameter(torch.zeros(1)) would be 0.0; use a nonzero value so the
    # attention path is actually exercised by the check.
    gamma = jnp.array(0.5, dtype=jnp.float32)

    y = self_attention(x, wq, bq, wk, bk, wv, bv, gamma)
    y = jax.block_until_ready(y)

    y_ref = reference(x, wq, bq, wk, bk, wv, bv, gamma)
    assert y.shape == (B, C, H, W)
    # bf16 MXU operands with f32 accumulation + approx reciprocal: loosened tol.
    assert jnp.allclose(y, y_ref, atol=3e-2, rtol=3e-2), (
        float(jnp.max(jnp.abs(y - y_ref))))

    print("KERNEL_OK")
</pallas_src>

<mosaic_0001>
module attributes {stable_mosaic.version = 11 : i64} {
  func.func @_self_attention_kernel(%arg0: i32, %arg1: memref<1x16x256xf32, #tpu.memory_space<vmem>>, %arg2: memref<32x16xbf16, #tpu.memory_space<vmem>>, %arg3: memref<32x1xf32, #tpu.memory_space<vmem>>, %arg4: memref<1x16x256xf32, #tpu.memory_space<vmem>>) attributes {dimension_semantics = [#tpu.dimension_semantics<parallel>], iteration_bounds = array<i64: 2>, scalar_prefetch = 0 : i64, scratch_operands = 0 : i64, tpu.core_type = #tpu.core_type<tc>, window_params = [{transform_indices = @transform_0, window_bounds = array<i64: 1, 16, 256>}, {pipeline_mode = #tpu.pipeline_mode<synchronous>, transform_indices = @transform_1, window_bounds = array<i64: 32, 16>}, {pipeline_mode = #tpu.pipeline_mode<synchronous>, transform_indices = @transform_2, window_bounds = array<i64: 32, 1>}, {transform_indices = @transform_3, window_bounds = array<i64: 1, 16, 256>}]} {
    %c0 = arith.constant 0 : index
    %c0_0 = arith.constant 0 : index
    %c0_1 = arith.constant 0 : index
    %0 = vector.load %arg1[%c0, %c0_0, %c0_1] : memref<1x16x256xf32, #tpu.memory_space<vmem>>, vector<1x16x256xf32>
    %1 = vector.shape_cast %0 : vector<1x16x256xf32> to vector<16x256xf32>
    %2 = arith.truncf %1 : vector<16x256xf32> to vector<16x256xbf16>
    %c0_2 = arith.constant 0 : index
    %c0_3 = arith.constant 0 : index
    %3 = vector.load %arg2[%c0_2, %c0_3] : memref<32x16xbf16, #tpu.memory_space<vmem>>, vector<32x16xbf16>
    %cst = arith.constant dense<0.000000e+00> : vector<32x256xf32>
    %4 = tpu.matmul %3, %2, %cst {dimension_numbers = #tpu.dot_dimension_numbers<[1], [0], [0], [1], [0, 0, 1, 1], [], []>} : vector<32x16xbf16>, vector<16x256xbf16>, vector<32x256xf32> -> vector<32x256xf32>
    %c0_4 = arith.constant 0 : index
    %c0_5 = arith.constant 0 : index
    %5 = vector.load %arg3[%c0_4, %c0_5] : memref<32x1xf32, #tpu.memory_space<vmem>>, vector<32x1xf32>
    %6 = vector.broadcast %5 : vector<32x1xf32> to vector<32x256xf32>
    %7 = arith.addf %4, %6 : vector<32x256xf32>
    %8 = vector.extract_strided_slice %7 {offsets = [0, 0], sizes = [8, 256], strides = [1, 1]} : vector<32x256xf32> to vector<8x256xf32>
    %9 = vector.extract_strided_slice %7 {offsets = [8, 0], sizes = [8, 256], strides = [1, 1]} : vector<32x256xf32> to vector<8x256xf32>
    %10 = vector.extract_strided_slice %7 {offsets = [16, 0], sizes = [16, 256], strides = [1, 1]} : vector<32x256xf32> to vector<16x256xf32>
    %11 = arith.truncf %8 : vector<8x256xf32> to vector<8x256xbf16>
    %12 = arith.truncf %9 : vector<8x256xf32> to vector<8x256xbf16>
    %cst_6 = arith.constant dense<0.000000e+00> : vector<256x256xf32>
    %13 = tpu.matmul %11, %12, %cst_6 {dimension_numbers = #tpu.dot_dimension_numbers<[0], [0], [1], [1], [0, 1, 1, 1], [], []>} : vector<8x256xbf16>, vector<8x256xbf16>, vector<256x256xf32> -> vector<256x256xf32>
    %cst_7 = arith.constant dense<0xFF800000> : vector<256xf32>
    %14 = vector.multi_reduction <maximumf>, %13, %cst_7 [1] : vector<256x256xf32> to vector<256xf32>
    %15 = vector.shape_cast %14 : vector<256xf32> to vector<256x1xf32>
    %16 = vector.broadcast %15 : vector<256x1xf32> to vector<256x256xf32>
    %17 = arith.subf %13, %16 : vector<256x256xf32>
    %18 = math.exp %17 : vector<256x256xf32>
    %19 = arith.truncf %18 : vector<256x256xf32> to vector<256x256xbf16>
    %cst_8 = arith.constant 1.000000e+00 : bf16
    %20 = vector.broadcast %cst_8 : bf16 to vector<1x256xbf16>
    %cst_9 = arith.constant dense<0.000000e+00> : vector<1x256xf32>
    %21 = tpu.matmul %20, %19, %cst_9 {dimension_numbers = #tpu.dot_dimension_numbers<[1], [1], [0], [0], [0, 0, 1, 0], [], []>} : vector<1x256xbf16>, vector<256x256xbf16>, vector<1x256xf32> -> vector<1x256xf32>
    %22 = arith.truncf %10 : vector<16x256xf32> to vector<16x256xbf16>
    %cst_10 = arith.constant dense<0.000000e+00> : vector<16x256xf32>
    %23 = tpu.matmul %22, %19, %cst_10 {dimension_numbers = #tpu.dot_dimension_numbers<[1], [1], [0], [0], [0, 0, 1, 0], [], []>} : vector<16x256xbf16>, vector<256x256xbf16>, vector<16x256xf32> -> vector<16x256xf32>
    %24 = tpu.reciprocal %21 {approx = true} : vector<1x256xf32> -> vector<1x256xf32>
    %25 = vector.broadcast %24 : vector<1x256xf32> to vector<16x256xf32>
    %26 = arith.mulf %23, %25 : vector<16x256xf32>
    %27 = arith.addf %26, %1 : vector<16x256xf32>
    %c0_11 = arith.constant 0 : index
    %c0_12 = arith.constant 0 : index
    %c0_13 = arith.constant 0 : index
    %28 = vector.load %arg4[%c0_11, %c0_12, %c0_13] : memref<1x16x256xf32, #tpu.memory_space<vmem>>, vector<1x16x256xf32>
    %29 = vector.shape_cast %28 : vector<1x16x256xf32> to vector<16x256xf32>
    %30 = vector.shape_cast %27 : vector<16x256xf32> to vector<1x16x256xf32>
    tpu.vector_store %arg4[%c0_11, %c0_12, %c0_13], %30 {strides = array<i32>} : memref<1x16x256xf32, #tpu.memory_space<vmem>>, vector<1x16x256xf32>,
    return
  }
  func.func @transform_0(%arg0: i32) -> (i32, i32, i32) {
    %c0_i32 = arith.constant 0 : i32
    %c0_i32_0 = arith.constant 0 : i32
    %c0_i32_1 = arith.constant 0 : i32
    return %arg0, %c0_i32, %c0_i32_0 : i32, i32, i32
  }
  func.func @transform_1(%arg0: i32) -> (i32, i32) {
    %c0_i32 = arith.constant 0 : i32
    %c0_i32_0 = arith.constant 0 : i32
    %c0_i32_1 = arith.constant 0 : i32
    return %c0_i32, %c0_i32_0 : i32, i32
  }
  func.func @transform_2(%arg0: i32) -> (i32, i32) {
    %c0_i32 = arith.constant 0 : i32
    %c0_i32_0 = arith.constant 0 : i32
    %c0_i32_1 = arith.constant 0 : i32
    return %c0_i32, %c0_i32_0 : i32, i32
  }
  func.func @transform_3(%arg0: i32) -> (i32, i32, i32) {
    %c0_i32 = arith.constant 0 : i32
    %c0_i32_0 = arith.constant 0 : i32
    %c0_i32_1 = arith.constant 0 : i32
    return %arg0, %c0_i32, %c0_i32_0 : i32, i32, i32
  }
}

</mosaic_0001>

<llo_original>
// kernel: tpu_custom_call.1
$region0: #{tpu_custom_call.1}
  #allocation0 [shape = 'u32[]', space=smem, size = 0x4, offset = 0x4, fixed_abs, tag = 'smem constant byte address 0x4 - core index']
  #allocation1 [shape = 'u32[72,128]{1,0:T(1,128)}', space=vmem, size = 0x9000, scoped, tag = 'internal scratch']
  %s0 = inlined_call_operand.hbm [shape: f32[2,16,256], index: 0, kind: input, shape index: {}]
  %s1 = inlined_call_operand.vmem [shape: bf16[32,16], index: 1, kind: input, shape index: {}]
  %s2 = inlined_call_operand.vmem [shape: f32[32,1], index: 2, kind: input, shape index: {}]
  %s3 = inlined_call_operand.hbm [shape: f32[2,16,256], index: 3, kind: output, shape index: {}]
  %s4 = sld [smem:[#allocation0]]
  $region49: #{tpu_custom_call.1} parent=0
    _
  %s6 = ssub.s32 1, %s4
  %s7 = scalar_select 0, %s6, %s4
  $region1: #{tpu_custom_call.1} parent=0
    #allocation2 [shape = 'u8[32768]{0}', space=vmem, size = 0x8000, scoped, tag = 'input window, operand 0']
    #allocation3 [shape = 's32[2]{0}', space=sflag, size = 0x8, scoped, tag = 'scoped memory for tpu_custom_call.1']
    #allocation4 [shape = 's32[2]{0}', space=sflag, size = 0x8, scoped, tag = 'scoped memory for tpu_custom_call.1']
    #allocation5 [shape = 'u8[32768]{0}', space=vmem, size = 0x8000, scoped, tag = 'output window, operand 0']
    %8 = vsyncpa [#allocation3], 0
    %s9 = scalar_lea.sflag [#allocation3], 1
    %10 = vsyncpa %s9, 0
    %11 = vsyncpa [#allocation4], 0
    %s12 = scalar_lea.sflag [#allocation4], 1
    %13 = vsyncpa %s12, 0
    loop: start=0, step=1, limit=4
    $region2: #{tpu_custom_call.1} parent=1 // loop_pre_header
      _
    $region3: #{tpu_custom_call.1} parent=1 // loop_header
      %s15 = sphi 0, %s19
      %p16 = scmp.ge.s32.totalorder %s15, 4
      %s25 = sphi 0, %s27
      %s28 = sphi 0, %s25
      %s29 = sphi 0, %s28
      %s45 = sphi 0, %s29
      %s49 = sphi 0, %s49
      %s51 = sphi 0, %s49
      %s52 = sphi 0, %s51
      %s66 = sphi 0, %s52
      %s70 = sphi 0, %s70
      %s72 = sphi 0, %s70
      %s73 = sphi 0, %s72
      %s87 = sphi 0, %s73
      %s93 = sphi 0, %s95
      %s96 = sphi 0, %s93
      %s97 = sphi 0, %s96
      %s113 = sphi 0, %s97
    $region4: #{tpu_custom_call.1} parent=1 // loop_header_branch
      %18 = sbr.rel (%p16) target = $region8
    $region5: #{tpu_custom_call.1} parent=1 // loop_body
      %s20 = ssub.s32 %s15, 1
      %s21 = ssub.s32 %s15, 2
      %s22 = sadd.s32 %s15, 1
      %s23 = ssub.s32 %s15, %s22
      %p24 = scmp.eq.s32.totalorder %s23, 0
      %s26 = sadd.s32 %s25, 1
      %s27 = scalar_select %p24, %s25, %s26
      %p30 = pneg %p24
      %p31 = scmp.eq.s32.totalorder %s15, 1
      %p32 = por %p30, %p31
      %p33 = scmp.ne.s32.totalorder %s25, %s28
      %p34 = scmp.eq.s32.totalorder %s15, 0
      %p35 = por %p33, %p34
      %p36 = scmp.ne.s32.totalorder %s25, %s28
      %p37 = scmp.eq.s32.totalorder %s20, 1
      %p38 = por %p36, %p37
      %p39 = scmp.ne.s32.totalorder %s28, %s29
      %p40 = scmp.eq.s32.totalorder %s20, 0
      %p41 = por %p39, %p40
      %p42 = scmp.ne.s32.totalorder %s28, %s29
      %p43 = scmp.eq.s32.totalorder %s21, 1
      %p44 = por %p42, %p43
      %p46 = scmp.ne.s32.totalorder %s29, %s45
      %p47 = scmp.eq.s32.totalorder %s21, 0
      %p48 = por %p46, %p47
      %s50 = sadd.s32 %s49, 1
      %p53 = scmp.eq.s32.totalorder %s15, 1
      %p54 = scmp.ne.s32.totalorder %s49, %s51
      %p55 = scmp.eq.s32.totalorder %s15, 0
      %p56 = por %p54, %p55
      %p57 = scmp.ne.s32.totalorder %s49, %s51
      %p58 = scmp.eq.s32.totalorder %s20, 1
      %p59 = por %p57, %p58
      %p60 = scmp.ne.s32.totalorder %s51, %s52
      %p61 = scmp.eq.s32.totalorder %s20, 0
      %p62 = por %p60, %p61
      %p63 = scmp.ne.s32.totalorder %s51, %s52
      %p64 = scmp.eq.s32.totalorder %s21, 1
      %p65 = por %p63, %p64
      %p67 = scmp.ne.s32.totalorder %s52, %s66
      %p68 = scmp.eq.s32.totalorder %s21, 0
      %p69 = por %p67, %p68
      %s71 = sadd.s32 %s70, 1
      %p74 = scmp.eq.s32.totalorder %s15, 1
      %p75 = scmp.ne.s32.totalorder %s70, %s72
      %p76 = scmp.eq.s32.totalorder %s15, 0
      %p77 = por %p75, %p76
      %p78 = scmp.ne.s32.totalorder %s70, %s72
      %p79 = scmp.eq.s32.totalorder %s20, 1
      %p80 = por %p78, %p79
      %p81 = scmp.ne.s32.totalorder %s72, %s73
      %p82 = scmp.eq.s32.totalorder %s20, 0
      %p83 = por %p81, %p82
      %p84 = scmp.ne.s32.totalorder %s72, %s73
      %p85 = scmp.eq.s32.totalorder %s21, 1
      %p86 = por %p84, %p85
      %p88 = scmp.ne.s32.totalorder %s73, %s87
      %p89 = scmp.eq.s32.totalorder %s21, 0
      %p90 = por %p88, %p89
      %s91 = ssub.s32 %s15, %s22
      %p92 = scmp.eq.s32.totalorder %s91, 0
      %s94 = sadd.s32 %s93, 1
      %s95 = scalar_select %p92, %s93, %s94
      %p98 = pneg %p92
      %p99 = scmp.eq.s32.totalorder %s15, 1
      %p100 = por %p98, %p99
      %p101 = scmp.ne.s32.totalorder %s93, %s96
      %p102 = scmp.eq.s32.totalorder %s15, 0
      %p103 = por %p101, %p102
      %p104 = scmp.ne.s32.totalorder %s93, %s96
      %p105 = scmp.eq.s32.totalorder %s20, 1
      %p106 = por %p104, %p105
      %p107 = scmp.ne.s32.totalorder %s96, %s97
      %p108 = scmp.eq.s32.totalorder %s20, 0
      %p109 = por %p107, %p108
      %p110 = scmp.ne.s32.totalorder %s96, %s97
      %p111 = scmp.eq.s32.totalorder %s21, 1
      %p112 = por %p110, %p111
      %p114 = scmp.ne.s32.totalorder %s97, %s113
      %p115 = scmp.eq.s32.totalorder %s21, 0
      %p116 = por %p114, %p115
      %p117 = scmp.le.s32.totalorder 1, %s15
      %p118 = scmp.lt.s32.totalorder %s15, 3
      %p119 = pnand %p117, %p118
      %p120 = pneg %p119
      // Predicated region
      $region9: #{tpu_custom_call.1} parent=5 // pred_check
        _
      $region10: #{tpu_custom_call.1} parent=5 // pred_check_branch
        %122 = sbr.rel (%p119) target = $region12
      $region11: #{tpu_custom_call.1} parent=5 // pred_region
        %s123 = ssub.s32 %s15, 1
        // Predicated region
        $region13: #{tpu_custom_call.1} parent=11 // pred_check
          %p124 = pneg %p62
        $region14: #{tpu_custom_call.1} parent=11 // pred_check_branch
          %126 = sbr.rel (%p124) target = $region16
        $region15: #{tpu_custom_call.1} parent=11 // pred_region
          _
        $region16: #{tpu_custom_call.1} parent=11 // pred_fallthru
          _
        // Predicated region
        $region17: #{tpu_custom_call.1} parent=11 // pred_check
          %p127 = pneg %p83
        $region18: #{tpu_custom_call.1} parent=11 // pred_check_branch
          %129 = sbr.rel (%p127) target = $region20
        $region19: #{tpu_custom_call.1} parent=11 // pred_region
          _
        $region20: #{tpu_custom_call.1} parent=11 // pred_fallthru
          _
      $region12: #{tpu_custom_call.1} parent=5 // pred_fallthru
        _
      %p130 = scmp.lt.s32.totalorder %s15, 2
      // Predicated region
      $region21: #{tpu_custom_call.1} parent=5 // pred_check
        %p131 = pneg %p130
      $region22: #{tpu_custom_call.1} parent=5 // pred_check_branch
        %133 = sbr.rel (%p131) target = $region24
      $region23: #{tpu_custom_call.1} parent=5 // pred_region
        // Predicated region
        $region25: #{tpu_custom_call.1} parent=23 // pred_check
          %p134 = pneg %p35
        $region26: #{tpu_custom_call.1} parent=23 // pred_check_branch
          %136 = sbr.rel (%p134) target = $region28
        $region27: #{tpu_custom_call.1} parent=23 // pred_region
          %s137 = sand.u32 %s25, 1
          %s138 = scalar_lea.sflag [#allocation3], %s137
          %s139 = sand.u32 %s25, 1
          %s140 = smul.addr %s139, 32
          %s141 = scalar_lea.vmem [#allocation2], %s140
          %143 = vsyncadd %s138, 0
          %s144 = smul.addr %s15, 4
          %s145 = smul.addr %s144, 8
          %s146 = scalar_lea.hbm %s0, %s145
          %s147 = sshll.u32 %s146, 4
          %s148 = int_to_ptr.hbm [resolvable:$true] %s147
          %s149 = sshll.u32 %s141, 4
          %s150 = int_to_ptr.vmem [resolvable:$true] %s149
          %155 = dma.hbm_to_vmem [thread:$0]  %s148, 512, %s150, %s138, 256, 256, 16
        $region28: #{tpu_custom_call.1} parent=23 // pred_fallthru
          _
      $region24: #{tpu_custom_call.1} parent=5 // pred_fallthru
        _
      %p156 = scmp.le.s32.totalorder 1, %s15
      %p157 = scmp.lt.s32.totalorder %s15, 3
      %p158 = pnand %p156, %p157
      %p159 = pneg %p158
      // Predicated region
      $region29: #{tpu_custom_call.1} parent=5 // pred_check
        _
      $region30: #{tpu_custom_call.1} parent=5 // pred_check_branch
        %161 = sbr.rel (%p158) target = $region32
      $region31: #{tpu_custom_call.1} parent=5 // pred_region
        %s162 = ssub.s32 %s15, 1
        %s163 = sand.u32 %s28, 1
        %s164 = scalar_lea.sflag [#allocation3], %s163
        %s165 = sand.u32 %s28, 1
        %s166 = smul.addr %s165, 32
        %s167 = scalar_lea.vmem [#allocation2], %s166
        // Predicated region
        $region33: #{tpu_custom_call.1} parent=31 // pred_check
          %p168 = pneg %p41
        $region34: #{tpu_custom_call.1} parent=31 // pred_check_branch
          %170 = sbr.rel (%p168) target = $region36
        $region35: #{tpu_custom_call.1} parent=31 // pred_region
          %172 = dma.done %s164, 512
        $region36: #{tpu_custom_call.1} parent=31 // pred_fallthru
          _
        %s173 = sand.u32 %s28, 1
        %s174 = scalar_lea.sflag [#allocation3], %s173
        %s175 = sand.u32 %s28, 1
        %s176 = smul.addr %s175, 32
        %s177 = scalar_lea.vmem [#allocation2], %s176
        %p178 = pneg %p41
        %p179 = pneg %p38
        %p180 = pneg %p62
        %p181 = pneg %p59
        %p182 = pneg %p83
        %p183 = pneg %p80
        %p184 = pneg %p109
        %p185 = pneg %p106
        %s186 = sand.u32 %s96, 1
        %s187 = scalar_lea.sflag [#allocation4], %s186
        %s188 = sand.u32 %s96, 1
        %s189 = smul.addr %s188, 32
        %s190 = scalar_lea.vmem [#allocation5], %s189
        %v193 = vld [vmem:[%s167] sm:$0xff]
        %v194 = vld [vmem:[%s167 + $0x8] sm:$0xff]
        %v195 = vld [vmem:[%s167 + $0x10] sm:$0xff]
        %v196 = vld [vmem:[%s167 + $0x18] sm:$0xff]
        %v197 = vpack.c.bf16 %v195, %v193
        %v198 = vpack.c.bf16 %v196, %v194
        %v199 = vld [vmem:[%s1] sm:$0xf]
        %v200 = vld [vmem:[%s1 + $0x4] sm:$0xf]
        %v201 = vld [vmem:[%s1 + $0x8] sm:$0xf]
        %v202 = vld [vmem:[%s1 + $0xc] sm:$0xf]
        %v203 = vld [vmem:[%s2] sm:$0xff]
        %v204 = vld [vmem:[%s2 + $0x8] sm:$0xff]
        %v205 = vld [vmem:[%s2 + $0x10] sm:$0xff]
        %v206 = vld [vmem:[%s2 + $0x18] sm:$0xff]
        %208 = vset.pattern.permute.xlu0 0
        %209 = vperm.xlu0 %208, %v203
        %v210 = vpop.permute.xlu0 %209
        %213 = vset.pattern.permute.xlu0 0
        %214 = vperm.xlu0 %213, %v204
        %v215 = vpop.permute.xlu0 %214
        %218 = vset.pattern.permute.xlu0 0
        %219 = vperm.xlu0 %218, %v205
        %v220 = vpop.permute.xlu0 %219
        %223 = vset.pattern.permute.xlu0 0
        %224 = vperm.xlu0 %223, %v206
        %v225 = vpop.permute.xlu0 %224
        %v231 = vunpack.c.l.b16 %v199
        %v232 = vunpack.c.l.b16 %v200
        %v233 = vunpack.c.l.b16 %v201
        %v234 = vunpack.c.l.b16 %v202
        %v235 = vpack.c.b16 %v232, %v231
        %v236 = vpack.c.b16 %v234, %v233
        %vm237 = vcmask 130048
        %v239 = vsel %vm237, %v235, 0
        %v242 = vsel %vm237, %v236, 0
        %244 = vmatpush.bf16.msra.mxu0 0
        %245 = vmatpush.bf16.msra.mxu0 0
        %246 = vmatpush.bf16.msra.mxu0 0
        %247 = vmatpush.bf16.msra.mxu0 0
        %248 = vmatpush.bf16.msra.mxu0 0
        %249 = vmatpush.bf16.msra.mxu0 0
        %250 = vmatpush.bf16.msra.mxu0 0
        %251 = vmatpush.bf16.msra.mxu0 %v197
        %252 = vmatmul.bf16.gmra.mxu0 %v239
        %v253 = vpop.f32.mrf.mxu0
        %v254 = vadd.f32 %v210, %v253
        %v255 = vpop.f32.mrf.mxu0
        %v256 = vadd.f32 %v215, %v255
        %257 = vmatmul.bf16.gmra.mxu0 %v242
        %v258 = vpop.f32.mrf.mxu0
        %v259 = vadd.f32 %v220, %v258
        %v260 = vpop.f32.mrf.mxu0
        %v261 = vadd.f32 %v225, %v260
        %262 = vdwg.mxu0
        %263 = vmatpush.bf16.msra.mxu0 0
        %264 = vmatpush.bf16.msra.mxu0 0
        %265 = vmatpush.bf16.msra.mxu0 0
        %266 = vmatpush.bf16.msra.mxu0 0
        %267 = vmatpush.bf16.msra.mxu0 0
        %268 = vmatpush.bf16.msra.mxu0 0
        %269 = vmatpush.bf16.msra.mxu0 0
        %270 = vmatpush.bf16.msra.mxu0 %v198
        %271 = vmatmul.bf16.gmra.mxu0 %v239
        %v272 = vpop.f32.mrf.mxu0
        %v273 = vadd.f32 %v210, %v272
        %v274 = vpop.f32.mrf.mxu0
        %v275 = vadd.f32 %v215, %v274
        %276 = vmatmul.bf16.gmra.mxu0 %v242
        %v277 = vpop.f32.mrf.mxu0
        %v278 = vadd.f32 %v220, %v277
        %v279 = vpop.f32.mrf.mxu0
        %v280 = vadd.f32 %v225, %v279
        %281 = vdwg.mxu0
        %v282 = vpack.c.bf16 %v254, %v254
        %v283 = vpack.c.bf16 %v273, %v273
        %v284 = vpack.c.bf16 %v256, %v256
        %v285 = vpack.c.bf16 %v275, %v275
        %286 = vxpose.binary.xlu0.c.b16.start [1/16] %v283, %v282, 128
        %287 = vxpose.binary.xlu0.c.b16.cont [2/16] 0, 0, 128
        %288 = vxpose.binary.xlu0.c.b16.cont [3/16] 0, 0, 128
        %289 = vxpose.binary.xlu0.c.b16.cont [4/16] 0, 0, 128
        %290 = vxpose.binary.xlu0.c.b16.cont [5/16] 0, 0, 128
        %291 = vxpose.binary.xlu0.c.b16.cont [6/16] 0, 0, 128
        %292 = vxpose.binary.xlu0.c.b16.cont [7/16] 0, 0, 128
        %293 = vxpose.binary.xlu0.c.b16.end [8/16] 0, 0, 128
        %v294 = vpop.trf.xlu0
        %v295 = vpop.trf.xlu0
        %v296 = vpop.trf.xlu0
        %v297 = vpop.trf.xlu0
        %v298 = vpop.trf.xlu0
        %v299 = vpop.trf.xlu0
        %v300 = vpop.trf.xlu0
        %v301 = vpop.trf.xlu0
        %v302 = vpop.trf.xlu0
        %v303 = vpop.trf.xlu0
        %v304 = vpop.trf.xlu0
        %v305 = vpop.trf.xlu0
        %v306 = vpop.trf.xlu0
        %v307 = vpop.trf.xlu0
        %v308 = vpop.trf.xlu0
        %v309 = vpop.trf.xlu0
        %vm310 = vcmask 64512
        %v312 = vsel %vm310, %v294, 0
        %v315 = vsel %vm310, %v296, 0
        %v318 = vsel %vm310, %v298, 0
        %v321 = vsel %vm310, %v300, 0
        %v324 = vsel %vm310, %v302, 0
        %v327 = vsel %vm310, %v304, 0
        %v330 = vsel %vm310, %v306, 0
        %v333 = vsel %vm310, %v308, 0
        %v336 = vsel %vm310, %v295, 0
        %v339 = vsel %vm310, %v297, 0
        %v342 = vsel %vm310, %v299, 0
        %v345 = vsel %vm310, %v301, 0
        %v348 = vsel %vm310, %v303, 0
        %v351 = vsel %vm310, %v305, 0
        %v354 = vsel %vm310, %v307, 0
        %v357 = vsel %vm310, %v309, 0
        %vm359 = vcmask 1043456
        %v361 = vsel %vm359, %v284, 0
        %v364 = vsel %vm359, %v285, 0
        %366 = vmatpush.bf16.msra.mxu0 0
        %367 = vmatpush.bf16.msra.mxu0 0
        %368 = vmatpush.bf16.msra.mxu0 0
        %369 = vmatpush.bf16.msra.mxu0 0
        %370 = vmatpush.bf16.msra.mxu0 0
        %371 = vmatpush.bf16.msra.mxu0 0
        %372 = vmatpush.bf16.msra.mxu0 0
        %373 = vmatpush.bf16.msra.mxu0 %v361
        %374 = vmatmul.bf16.gmra.mxu0 %v312
        %v375 = vpop.f32.mrf.mxu0
        %v376 = vadd.f32 0.0, %v375
        %v377 = vpop.f32.mrf.mxu0
        %v378 = vadd.f32 0.0, %v377
        %379 = vmatmul.bf16.gmra.mxu0 %v315
        %v380 = vpop.f32.mrf.mxu0
        %v381 = vadd.f32 0.0, %v380
        %v382 = vpop.f32.mrf.mxu0
        %v383 = vadd.f32 0.0, %v382
        %384 = vmatmul.bf16.gmra.mxu0 %v318
        %v385 = vpop.f32.mrf.mxu0
        %v386 = vadd.f32 0.0, %v385
        %v387 = vpop.f32.mrf.mxu0
        %v388 = vadd.f32 0.0, %v387
        %389 = vmatmul.bf16.gmra.mxu0 %v321
        %v390 = vpop.f32.mrf.mxu0
        %v391 = vadd.f32 0.0, %v390
        %v392 = vpop.f32.mrf.mxu0
        %v393 = vadd.f32 0.0, %v392
        %394 = vmatmul.bf16.gmra.mxu0 %v324
        %v395 = vpop.f32.mrf.mxu0
        %v396 = vadd.f32 0.0, %v395
        %v397 = vpop.f32.mrf.mxu0
        %v398 = vadd.f32 0.0, %v397
        %399 = vmatmul.bf16.gmra.mxu0 %v327
        %v400 = vpop.f32.mrf.mxu0
        %v401 = vadd.f32 0.0, %v400
        %v402 = vpop.f32.mrf.mxu0
        %v403 = vadd.f32 0.0, %v402
        %404 = vmatmul.bf16.gmra.mxu0 %v330
        %v405 = vpop.f32.mrf.mxu0
        %v406 = vadd.f32 0.0, %v405
        %v407 = vpop.f32.mrf.mxu0
        %v408 = vadd.f32 0.0, %v407
        %409 = vmatmul.bf16.gmra.mxu0 %v333
        %v410 = vpop.f32.mrf.mxu0
        %v411 = vadd.f32 0.0, %v410
        %v412 = vpop.f32.mrf.mxu0
        %v413 = vadd.f32 0.0, %v412
        %414 = vmatmul.bf16.gmra.mxu0 %v336
        %v415 = vpop.f32.mrf.mxu0
        %v416 = vadd.f32 0.0, %v415
        %v417 = vpop.f32.mrf.mxu0
        %v418 = vadd.f32 0.0, %v417
        %419 = vmatmul.bf16.gmra.mxu0 %v339
        %v420 = vpop.f32.mrf.mxu0
        %v421 = vadd.f32 0.0, %v420
        %v422 = vpop.f32.mrf.mxu0
        %v423 = vadd.f32 0.0, %v422
        %424 = vmatmul.bf16.gmra.mxu0 %v342
        %v425 = vpop.f32.mrf.mxu0
        %v426 = vadd.f32 0.0, %v425
        %v427 = vpop.f32.mrf.mxu0
        %v428 = vadd.f32 0.0, %v427
        %429 = vmatmul.bf16.gmra.mxu0 %v345
        %v430 = vpop.f32.mrf.mxu0
        %v431 = vadd.f32 0.0, %v430
        %v432 = vpop.f32.mrf.mxu0
        %v433 = vadd.f32 0.0, %v432
        %434 = vmatmul.bf16.gmra.mxu0 %v348
        %v435 = vpop.f32.mrf.mxu0
        %v436 = vadd.f32 0.0, %v435
        %v437 = vpop.f32.mrf.mxu0
        %v438 = vadd.f32 0.0, %v437
        %439 = vmatmul.bf16.gmra.mxu0 %v351
        %v440 = vpop.f32.mrf.mxu0
        %v441 = vadd.f32 0.0, %v440
        %v442 = vpop.f32.mrf.mxu0
        %v443 = vadd.f32 0.0, %v442
        %444 = vmatmul.bf16.gmra.mxu0 %v354
        %v445 = vpop.f32.mrf.mxu0
        %v446 = vadd.f32 0.0, %v445
        %v447 = vpop.f32.mrf.mxu0
        %v448 = vadd.f32 0.0, %v447
        %449 = vmatmul.bf16.gmra.mxu0 %v357
        %v450 = vpop.f32.mrf.mxu0
        %v451 = vadd.f32 0.0, %v450
        %v452 = vpop.f32.mrf.mxu0
        %v453 = vadd.f32 0.0, %v452
        %454 = vdwg.mxu0
        %455 = vmatpush.bf16.msra.mxu0 0
        %456 = vmatpush.bf16.msra.mxu0 0
        %457 = vmatpush.bf16.msra.mxu0 0
        %458 = vmatpush.bf16.msra.mxu0 0
        %459 = vmatpush.bf16.msra.mxu0 0
        %460 = vmatpush.bf16.msra.mxu0 0
        %461 = vmatpush.bf16.msra.mxu0 0
        %462 = vmatpush.bf16.msra.mxu0 %v364
        %463 = vmatmul.bf16.gmra.mxu0 %v312
        %v464 = vpop.f32.mrf.mxu0
        %v465 = vadd.f32 0.0, %v464
        %v466 = vpop.f32.mrf.mxu0
        %v467 = vadd.f32 0.0, %v466
        %468 = vmatmul.bf16.gmra.mxu0 %v315
        %v469 = vpop.f32.mrf.mxu0
        %v470 = vadd.f32 0.0, %v469
        %v471 = vpop.f32.mrf.mxu0
        %v472 = vadd.f32 0.0, %v471
        %473 = vmatmul.bf16.gmra.mxu0 %v318
        %v474 = vpop.f32.mrf.mxu0
        %v475 = vadd.f32 0.0, %v474
        %v476 = vpop.f32.mrf.mxu0
        %v477 = vadd.f32 0.0, %v476
        %478 = vmatmul.bf16.gmra.mxu0 %v321
        %v479 = vpop.f32.mrf.mxu0
        %v480 = vadd.f32 0.0, %v479
        %v481 = vpop.f32.mrf.mxu0
        %v482 = vadd.f32 0.0, %v481
        %483 = vmatmul.bf16.gmra.mxu0 %v324
        %v484 = vpop.f32.mrf.mxu0
        %v485 = vadd.f32 0.0, %v484
        %v486 = vpop.f32.mrf.mxu0
        %v487 = vadd.f32 0.0, %v486
        %488 = vmatmul.bf16.gmra.mxu0 %v327
        %v489 = vpop.f32.mrf.mxu0
        %v490 = vadd.f32 0.0, %v489
        %v491 = vpop.f32.mrf.mxu0
        %v492 = vadd.f32 0.0, %v491
        %493 = vmatmul.bf16.gmra.mxu0 %v330
        %v494 = vpop.f32.mrf.mxu0
        %v495 = vadd.f32 0.0, %v494
        %v496 = vpop.f32.mrf.mxu0
        %v497 = vadd.f32 0.0, %v496
        %498 = vmatmul.bf16.gmra.mxu0 %v333
        %v499 = vpop.f32.mrf.mxu0
        %v500 = vadd.f32 0.0, %v499
        %v501 = vpop.f32.mrf.mxu0
        %v502 = vadd.f32 0.0, %v501
        %503 = vmatmul.bf16.gmra.mxu0 %v336
        %v504 = vpop.f32.mrf.mxu0
        %v505 = vadd.f32 0.0, %v504
        %v506 = vpop.f32.mrf.mxu0
        %v507 = vadd.f32 0.0, %v506
        %508 = vmatmul.bf16.gmra.mxu0 %v339
        %v509 = vpop.f32.mrf.mxu0
        %v510 = vadd.f32 0.0, %v509
        %v511 = vpop.f32.mrf.mxu0
        %v512 = vadd.f32 0.0, %v511
        %513 = vmatmul.bf16.gmra.mxu0 %v342
        %v514 = vpop.f32.mrf.mxu0
        %v515 = vadd.f32 0.0, %v514
        %v516 = vpop.f32.mrf.mxu0
        %v517 = vadd.f32 0.0, %v516
        %518 = vmatmul.bf16.gmra.mxu0 %v345
        %v519 = vpop.f32.mrf.mxu0
        %v520 = vadd.f32 0.0, %v519
        %v521 = vpop.f32.mrf.mxu0
        %v522 = vadd.f32 0.0, %v521
        %523 = vmatmul.bf16.gmra.mxu0 %v348
        %v524 = vpop.f32.mrf.mxu0
        %v525 = vadd.f32 0.0, %v524
        %v526 = vpop.f32.mrf.mxu0
        %v527 = vadd.f32 0.0, %v526
        %528 = vmatmul.bf16.gmra.mxu0 %v351
        %v529 = vpop.f32.mrf.mxu0
        %v530 = vadd.f32 0.0, %v529
        %v531 = vpop.f32.mrf.mxu0
        %v532 = vadd.f32 0.0, %v531
        %533 = vmatmul.bf16.gmra.mxu0 %v354
        %v534 = vpop.f32.mrf.mxu0
        %v535 = vadd.f32 0.0, %v534
        %v536 = vpop.f32.mrf.mxu0
        %v537 = vadd.f32 0.0, %v536
        %538 = vmatmul.bf16.gmra.mxu0 %v357
        %v539 = vpop.f32.mrf.mxu0
        %v540 = vadd.f32 0.0, %v539
        %v541 = vpop.f32.mrf.mxu0
        %v542 = vadd.f32 0.0, %v541
        %543 = vdwg.mxu0
        %v544 = vmax.f32 %v376, %v465
        %545 = vmax.xlane.f32.xlu0 %v544
        %v546 = vpop.xlane.xlu0 %545
        %v547 = vmax.f32 %v378, %v467
        %548 = vmax.xlane.f32.xlu0 %v547
        %v549 = vpop.xlane.xlu0 %548
        %v550 = vmax.f32 %v381, %v470
        %551 = vmax.xlane.f32.xlu0 %v550
        %v552 = vpop.xlane.xlu0 %551
        %v553 = vmax.f32 %v383, %v472
        %554 = vmax.xlane.f32.xlu0 %v553
        %v555 = vpop.xlane.xlu0 %554
        %v556 = vmax.f32 %v386, %v475
        %557 = vmax.xlane.f32.xlu0 %v556
        %v558 = vpop.xlane.xlu0 %557
        %v559 = vmax.f32 %v388, %v477
        %560 = vmax.xlane.f32.xlu0 %v559
        %v561 = vpop.xlane.xlu0 %560
        %v562 = vmax.f32 %v391, %v480
        %563 = vmax.xlane.f32.xlu0 %v562
        %v564 = vpop.xlane.xlu0 %563
        %v565 = vmax.f32 %v393, %v482
        %566 = vmax.xlane.f32.xlu0 %v565
        %v567 = vpop.xlane.xlu0 %566
        %v568 = vmax.f32 %v396, %v485
        %569 = vmax.xlane.f32.xlu0 %v568
        %v570 = vpop.xlane.xlu0 %569
        %v571 = vmax.f32 %v398, %v487
        %572 = vmax.xlane.f32.xlu0 %v571
        %v573 = vpop.xlane.xlu0 %572
        %v574 = vmax.f32 %v401, %v490
        %575 = vmax.xlane.f32.xlu0 %v574
        %v576 = vpop.xlane.xlu0 %575
        %v577 = vmax.f32 %v403, %v492
        %578 = vmax.xlane.f32.xlu0 %v577
        %v579 = vpop.xlane.xlu0 %578
        %v580 = vmax.f32 %v406, %v495
        %581 = vmax.xlane.f32.xlu0 %v580
        %v582 = vpop.xlane.xlu0 %581
        %v583 = vmax.f32 %v408, %v497
        %584 = vmax.xlane.f32.xlu0 %v583
        %v585 = vpop.xlane.xlu0 %584
        %v586 = vmax.f32 %v411, %v500
        %587 = vmax.xlane.f32.xlu0 %v586
        %v588 = vpop.xlane.xlu0 %587
        %v589 = vmax.f32 %v413, %v502
        %590 = vmax.xlane.f32.xlu0 %v589
        %v591 = vpop.xlane.xlu0 %590
        %v592 = vmax.f32 %v416, %v505
        %593 = vmax.xlane.f32.xlu0 %v592
        %v594 = vpop.xlane.xlu0 %593
        %v595 = vmax.f32 %v418, %v507
        %596 = vmax.xlane.f32.xlu0 %v595
        %v597 = vpop.xlane.xlu0 %596
        %v598 = vmax.f32 %v421, %v510
        %599 = vmax.xlane.f32.xlu0 %v598
        %v600 = vpop.xlane.xlu0 %599
        %v601 = vmax.f32 %v423, %v512
        %602 = vmax.xlane.f32.xlu0 %v601
        %v603 = vpop.xlane.xlu0 %602
        %v604 = vmax.f32 %v426, %v515
        %605 = vmax.xlane.f32.xlu0 %v604
        %v606 = vpop.xlane.xlu0 %605
        %v607 = vmax.f32 %v428, %v517
        %608 = vmax.xlane.f32.xlu0 %v607
        %v609 = vpop.xlane.xlu0 %608
        %v610 = vmax.f32 %v431, %v520
        %611 = vmax.xlane.f32.xlu0 %v610
        %v612 = vpop.xlane.xlu0 %611
        %v613 = vmax.f32 %v433, %v522
        %614 = vmax.xlane.f32.xlu0 %v613
        %v615 = vpop.xlane.xlu0 %614
        %v616 = vmax.f32 %v436, %v525
        %617 = vmax.xlane.f32.xlu0 %v616
        %v618 = vpop.xlane.xlu0 %617
        %v619 = vmax.f32 %v438, %v527
        %620 = vmax.xlane.f32.xlu0 %v619
        %v621 = vpop.xlane.xlu0 %620
        %v622 = vmax.f32 %v441, %v530
        %623 = vmax.xlane.f32.xlu0 %v622
        %v624 = vpop.xlane.xlu0 %623
        %v625 = vmax.f32 %v443, %v532
        %626 = vmax.xlane.f32.xlu0 %v625
        %v627 = vpop.xlane.xlu0 %626
        %v628 = vmax.f32 %v446, %v535
        %629 = vmax.xlane.f32.xlu0 %v628
        %v630 = vpop.xlane.xlu0 %629
        %v631 = vmax.f32 %v448, %v537
        %632 = vmax.xlane.f32.xlu0 %v631
        %v633 = vpop.xlane.xlu0 %632
        %v634 = vmax.f32 %v451, %v540
        %635 = vmax.xlane.f32.xlu0 %v634
        %v636 = vpop.xlane.xlu0 %635
        %v637 = vmax.f32 %v453, %v542
        %638 = vmax.xlane.f32.xlu0 %v637
        %v639 = vpop.xlane.xlu0 %638
        %v640 = vsub.f32 %v376, %v546
        %v641 = vsub.f32 %v465, %v546
        %v642 = vsub.f32 %v378, %v549
        %v643 = vsub.f32 %v467, %v549
        %v644 = vsub.f32 %v381, %v552
        %v645 = vsub.f32 %v470, %v552
        %v646 = vsub.f32 %v383, %v555
        %v647 = vsub.f32 %v472, %v555
        %v648 = vsub.f32 %v386, %v558
        %v649 = vsub.f32 %v475, %v558
        %v650 = vsub.f32 %v388, %v561
        %v651 = vsub.f32 %v477, %v561
        %v652 = vsub.f32 %v391, %v564
        %v653 = vsub.f32 %v480, %v564
        %v654 = vsub.f32 %v393, %v567
        %v655 = vsub.f32 %v482, %v567
        %v656 = vsub.f32 %v396, %v570
        %v657 = vsub.f32 %v485, %v570
        %v658 = vsub.f32 %v398, %v573
        %v659 = vsub.f32 %v487, %v573
        %v660 = vsub.f32 %v401, %v576
        %v661 = vsub.f32 %v490, %v576
        %v662 = vsub.f32 %v403, %v579
        %v663 = vsub.f32 %v492, %v579
        %v664 = vsub.f32 %v406, %v582
        %v665 = vsub.f32 %v495, %v582
        %v666 = vsub.f32 %v408, %v585
        %v667 = vsub.f32 %v497, %v585
        %v668 = vsub.f32 %v411, %v588
        %v669 = vsub.f32 %v500, %v588
        %v670 = vsub.f32 %v413, %v591
        %v671 = vsub.f32 %v502, %v591
        %v672 = vsub.f32 %v416, %v594
        %v673 = vsub.f32 %v505, %v594
        %v674 = vsub.f32 %v418, %v597
        %v675 = vsub.f32 %v507, %v597
        %v676 = vsub.f32 %v421, %v600
        %v677 = vsub.f32 %v510, %v600
        %v678 = vsub.f32 %v423, %v603
        %v679 = vsub.f32 %v512, %v603
        %v680 = vsub.f32 %v426, %v606
        %v681 = vsub.f32 %v515, %v606
        %v682 = vsub.f32 %v428, %v609
        %v683 = vsub.f32 %v517, %v609
        %v684 = vsub.f32 %v431, %v612
        %v685 = vsub.f32 %v520, %v612
        %v686 = vsub.f32 %v433, %v615
        %v687 = vsub.f32 %v522, %v615
        %v688 = vsub.f32 %v436, %v618
        %v689 = vsub.f32 %v525, %v618
        %v690 = vsub.f32 %v438, %v621
        %v691 = vsub.f32 %v527, %v621
        %v692 = vsub.f32 %v441, %v624
        %v693 = vsub.f32 %v530, %v624
        %v694 = vsub.f32 %v443, %v627
        %v695 = vsub.f32 %v532, %v627
        %v696 = vsub.f32 %v446, %v630
        %v697 = vsub.f32 %v535, %v630
        %v698 = vsub.f32 %v448, %v633
        %v699 = vsub.f32 %v537, %v633
        %v700 = vsub.f32 %v451, %v636
        %v701 = vsub.f32 %v540, %v636
        %v702 = vsub.f32 %v453, %v639
        %v703 = vsub.f32 %v542, %v639
        %v704 = vmul.f32 %v640, 1.442695
        %v705 = vpow.pop %v704
        %v706 = vmul.f32 %v641, 1.442695
        %v707 = vpow.pop %v706
        %v708 = vmul.f32 %v642, 1.442695
        %v709 = vpow.pop %v708
        %v710 = vmul.f32 %v643, 1.442695
        %v711 = vpow.pop %v710
        %v712 = vmul.f32 %v644, 1.442695
        %v713 = vpow.pop %v712
        %v714 = vmul.f32 %v645, 1.442695
        %v715 = vpow.pop %v714
        %v716 = vmul.f32 %v646, 1.442695
        %v717 = vpow.pop %v716
        %v718 = vmul.f32 %v647, 1.442695
        %v719 = vpow.pop %v718
        %v720 = vmul.f32 %v648, 1.442695
        %v721 = vpow.pop %v720
        %v722 = vmul.f32 %v649, 1.442695
        %v723 = vpow.pop %v722
        %v724 = vmul.f32 %v650, 1.442695
        %v725 = vpow.pop %v724
        %v726 = vmul.f32 %v651, 1.442695
        %v727 = vpow.pop %v726
        %v728 = vmul.f32 %v652, 1.442695
        %v729 = vpow.pop %v728
        %v730 = vmul.f32 %v653, 1.442695
        %v731 = vpow.pop %v730
        %v732 = vmul.f32 %v654, 1.442695
        %v733 = vpow.pop %v732
        %v734 = vmul.f32 %v655, 1.442695
        %v735 = vpow.pop %v734
        %v736 = vmul.f32 %v656, 1.442695
        %v737 = vpow.pop %v736
        %v738 = vmul.f32 %v657, 1.442695
        %v739 = vpow.pop %v738
        %v740 = vmul.f32 %v658, 1.442695
        %v741 = vpow.pop %v740
        %v742 = vmul.f32 %v659, 1.442695
        %v743 = vpow.pop %v742
        %v744 = vmul.f32 %v660, 1.442695
        %v745 = vpow.pop %v744
        %v746 = vmul.f32 %v661, 1.442695
        %v747 = vpow.pop %v746
        %v748 = vmul.f32 %v662, 1.442695
        %v749 = vpow.pop %v748
        %v750 = vmul.f32 %v663, 1.442695
        %v751 = vpow.pop %v750
        %v752 = vmul.f32 %v664, 1.442695
        %v753 = vpow.pop %v752
        %v754 = vmul.f32 %v665, 1.442695
        %v755 = vpow.pop %v754
        %v756 = vmul.f32 %v666, 1.442695
        %v757 = vpow.pop %v756
        %v758 = vmul.f32 %v667, 1.442695
        %v759 = vpow.pop %v758
        %v760 = vmul.f32 %v668, 1.442695
        %v761 = vpow.pop %v760
        %v762 = vmul.f32 %v669, 1.442695
        %v763 = vpow.pop %v762
        %v764 = vmul.f32 %v670, 1.442695
        %v765 = vpow.pop %v764
        %v766 = vmul.f32 %v671, 1.442695
        %v767 = vpow.pop %v766
        %v768 = vmul.f32 %v672, 1.442695
        %v769 = vpow.pop %v768
        %v770 = vmul.f32 %v673, 1.442695
        %v771 = vpow.pop %v770
        %v772 = vmul.f32 %v674, 1.442695
        %v773 = vpow.pop %v772
        %v774 = vmul.f32 %v675, 1.442695
        %v775 = vpow.pop %v774
        %v776 = vmul.f32 %v676, 1.442695
        %v777 = vpow.pop %v776
        %v778 = vmul.f32 %v677, 1.442695
        %v779 = vpow.pop %v778
        %v780 = vmul.f32 %v678, 1.442695
        %v781 = vpow.pop %v780
        %v782 = vmul.f32 %v679, 1.442695
        %v783 = vpow.pop %v782
        %v784 = vmul.f32 %v680, 1.442695
        %v785 = vpow.pop %v784
        %v786 = vmul.f32 %v681, 1.442695
        %v787 = vpow.pop %v786
        %v788 = vmul.f32 %v682, 1.442695
        %v789 = vpow.pop %v788
        %v790 = vmul.f32 %v683, 1.442695
        %v791 = vpow.pop %v790
        %v792 = vmul.f32 %v684, 1.442695
        %v793 = vpow.pop %v792
        %v794 = vmul.f32 %v685, 1.442695
        %v795 = vpow.pop %v794
        %v796 = vmul.f32 %v686, 1.442695
        %v797 = vpow.pop %v796
        %v798 = vmul.f32 %v687, 1.442695
        %v799 = vpow.pop %v798
        %v800 = vmul.f32 %v688, 1.442695
        %v801 = vpow.pop %v800
        %v802 = vmul.f32 %v689, 1.442695
        %v803 = vpow.pop %v802
        %v804 = vmul.f32 %v690, 1.442695
        %v805 = vpow.pop %v804
        %v806 = vmul.f32 %v691, 1.442695
        %v807 = vpow.pop %v806
        %v808 = vmul.f32 %v692, 1.442695
        %v809 = vpow.pop %v808
        %v810 = vmul.f32 %v693, 1.442695
        %v811 = vpow.pop %v810
        %v812 = vmul.f32 %v694, 1.442695
        %v813 = vpow.pop %v812
        %v814 = vmul.f32 %v695, 1.442695
        %v815 = vpow.pop %v814
        %v816 = vmul.f32 %v696, 1.442695
        %v817 = vpow.pop %v816
        %v818 = vmul.f32 %v697, 1.442695
        %v819 = vpow.pop %v818
        %v820 = vmul.f32 %v698, 1.442695
        %v821 = vpow.pop %v820
        %v822 = vmul.f32 %v699, 1.442695
        %v823 = vpow.pop %v822
        %v824 = vmul.f32 %v700, 1.442695
        %v825 = vpow.pop %v824
        %v826 = vmul.f32 %v701, 1.442695
        %v827 = vpow.pop %v826
        %v828 = vmul.f32 %v702, 1.442695
        %v829 = vpow.pop %v828
        %v830 = vmul.f32 %v703, 1.442695
        %v831 = vpow.pop %v830
        %v832 = vpack.c.bf16 %v709, %v705
        %v833 = vpack.c.bf16 %v711, %v707
        %v834 = vpack.c.bf16 %v717, %v713
        %v835 = vpack.c.bf16 %v719, %v715
        %v836 = vpack.c.bf16 %v725, %v721
        %v837 = vpack.c.bf16 %v727, %v723
        %v838 = vpack.c.bf16 %v733, %v729
        %v839 = vpack.c.bf16 %v735, %v731
        %v840 = vpack.c.bf16 %v741, %v737
        %v841 = vpack.c.bf16 %v743, %v739
        %v842 = vpack.c.bf16 %v749, %v745
        %v843 = vpack.c.bf16 %v751, %v747
        %v844 = vpack.c.bf16 %v757, %v753
        %v845 = vpack.c.bf16 %v759, %v755
        %v846 = vpack.c.bf16 %v765, %v761
        %v847 = vpack.c.bf16 %v767, %v763
        %v848 = vpack.c.bf16 %v773, %v769
        %v849 = vpack.c.bf16 %v775, %v771
        %v850 = vpack.c.bf16 %v781, %v777
        %v851 = vpack.c.bf16 %v783, %v779
        %v852 = vpack.c.bf16 %v789, %v785
        %v853 = vpack.c.bf16 %v791, %v787
        %v854 = vpack.c.bf16 %v797, %v793
        %v855 = vpack.c.bf16 %v799, %v795
        %v856 = vpack.c.bf16 %v805, %v801
        %v857 = vpack.c.bf16 %v807, %v803
        %v858 = vpack.c.bf16 %v813, %v809
        %v859 = vpack.c.bf16 %v815, %v811
        %v860 = vpack.c.bf16 %v821, %v817
        %v861 = vpack.c.bf16 %v823, %v819
        %v862 = vpack.c.bf16 %v829, %v825
        %v863 = vpack.c.bf16 %v831, %v827
        %864 = vmatpush.bf16.xpose.msra.mxu0 %v846
        %865 = vmatpush.bf16.xpose.msra.mxu0 %v844
        %866 = vmatpush.bf16.xpose.msra.mxu0 %v842
        %867 = vmatpush.bf16.xpose.msra.mxu0 %v840
        %868 = vmatpush.bf16.xpose.msra.mxu0 %v838
        %869 = vmatpush.bf16.xpose.msra.mxu0 %v836
        %870 = vmatpush.bf16.xpose.msra.mxu0 %v834
        %871 = vmatpush.bf16.xpose.msra.mxu0 %v832
        %872 = vmatmul.bf16.gmra.mxu0 1065369472
        %v873 = vpop.f32.mrf.mxu0
        %v874 = vadd.f32 0.0, %v873
        %v875 = vpop.f32.mrf.mxu0
        %876 = vdwg.mxu0
        %877 = vmatpush.bf16.xpose.msra.mxu0 %v847
        %878 = vmatpush.bf16.xpose.msra.mxu0 %v845
        %879 = vmatpush.bf16.xpose.msra.mxu0 %v843
        %880 = vmatpush.bf16.xpose.msra.mxu0 %v841
        %881 = vmatpush.bf16.xpose.msra.mxu0 %v839
        %882 = vmatpush.bf16.xpose.msra.mxu0 %v837
        %883 = vmatpush.bf16.xpose.msra.mxu0 %v835
        %884 = vmatpush.bf16.xpose.msra.mxu0 %v833
        %885 = vmatmul.bf16.gmra.mxu0 1065369472
        %v886 = vpop.f32.mrf.mxu0
        %v887 = vadd.f32 %v874, %v886
        %v888 = vpop.f32.mrf.mxu0
        %889 = vdwg.mxu0
        %890 = vmatpush.bf16.xpose.msra.mxu0 %v862
        %891 = vmatpush.bf16.xpose.msra.mxu0 %v860
        %892 = vmatpush.bf16.xpose.msra.mxu0 %v858
        %893 = vmatpush.bf16.xpose.msra.mxu0 %v856
        %894 = vmatpush.bf16.xpose.msra.mxu0 %v854
        %895 = vmatpush.bf16.xpose.msra.mxu0 %v852
        %896 = vmatpush.bf16.xpose.msra.mxu0 %v850
        %897 = vmatpush.bf16.xpose.msra.mxu0 %v848
        %898 = vmatmul.bf16.gmra.mxu0 1065369472
        %v899 = vpop.f32.mrf.mxu0
        %v900 = vadd.f32 0.0, %v899
        %v901 = vpop.f32.mrf.mxu0
        %902 = vdwg.mxu0
        %903 = vmatpush.bf16.xpose.msra.mxu0 %v863
        %904 = vmatpush.bf16.xpose.msra.mxu0 %v861
        %905 = vmatpush.bf16.xpose.msra.mxu0 %v859
        %906 = vmatpush.bf16.xpose.msra.mxu0 %v857
        %907 = vmatpush.bf16.xpose.msra.mxu0 %v855
        %908 = vmatpush.bf16.xpose.msra.mxu0 %v853
        %909 = vmatpush.bf16.xpose.msra.mxu0 %v851
        %910 = vmatpush.bf16.xpose.msra.mxu0 %v849
        %911 = vmatmul.bf16.gmra.mxu0 1065369472
        %v912 = vpop.f32.mrf.mxu0
        %v913 = vadd.f32 %v900, %v912
        %v914 = vpop.f32.mrf.mxu0
        %915 = vdwg.mxu0
        %v916 = vpack.c.bf16 %v261, %v259
        %v917 = vpack.c.bf16 %v280, %v278
        %918 = vmatpush.bf16.xpose.msra.mxu0 %v846
        %919 = vmatpush.bf16.xpose.msra.mxu0 %v844
        %920 = vmatpush.bf16.xpose.msra.mxu0 %v842
        %921 = vmatpush.bf16.xpose.msra.mxu0 %v840
        %922 = vmatpush.bf16.xpose.msra.mxu0 %v838
        %923 = vmatpush.bf16.xpose.msra.mxu0 %v836
        %924 = vmatpush.bf16.xpose.msra.mxu0 %v834
        %925 = vmatpush.bf16.xpose.msra.mxu0 %v832
        %926 = vmatmul.bf16.gmra.mxu0 %v916
        %v927 = vpop.f32.mrf.mxu0
        %v928 = vadd.f32 0.0, %v927
        %v929 = vpop.f32.mrf.mxu0
        %v930 = vadd.f32 0.0, %v929
        %931 = vdwg.mxu0
        %932 = vmatpush.bf16.xpose.msra.mxu0 %v847
        %933 = vmatpush.bf16.xpose.msra.mxu0 %v845
        %934 = vmatpush.bf16.xpose.msra.mxu0 %v843
        %935 = vmatpush.bf16.xpose.msra.mxu0 %v841
        %936 = vmatpush.bf16.xpose.msra.mxu0 %v839
        %937 = vmatpush.bf16.xpose.msra.mxu0 %v837
        %938 = vmatpush.bf16.xpose.msra.mxu0 %v835
        %939 = vmatpush.bf16.xpose.msra.mxu0 %v833
        %940 = vmatmul.bf16.gmra.mxu0 %v917
        %v941 = vpop.f32.mrf.mxu0
        %v942 = vadd.f32 %v928, %v941
        %v943 = vpop.f32.mrf.mxu0
        %v944 = vadd.f32 %v930, %v943
        %945 = vdwg.mxu0
        %946 = vmatpush.bf16.xpose.msra.mxu0 %v862
        %947 = vmatpush.bf16.xpose.msra.mxu0 %v860
        %948 = vmatpush.bf16.xpose.msra.mxu0 %v858
        %949 = vmatpush.bf16.xpose.msra.mxu0 %v856
        %950 = vmatpush.bf16.xpose.msra.mxu0 %v854
        %951 = vmatpush.bf16.xpose.msra.mxu0 %v852
        %952 = vmatpush.bf16.xpose.msra.mxu0 %v850
        %953 = vmatpush.bf16.xpose.msra.mxu0 %v848
        %954 = vmatmul.bf16.gmra.mxu0 %v916
        %v955 = vpop.f32.mrf.mxu0
        %v956 = vadd.f32 0.0, %v955
        %v957 = vpop.f32.mrf.mxu0
        %v958 = vadd.f32 0.0, %v957
        %959 = vdwg.mxu0
        %960 = vmatpush.bf16.xpose.msra.mxu0 %v863
        %961 = vmatpush.bf16.xpose.msra.mxu0 %v861
        %962 = vmatpush.bf16.xpose.msra.mxu0 %v859
        %963 = vmatpush.bf16.xpose.msra.mxu0 %v857
        %964 = vmatpush.bf16.xpose.msra.mxu0 %v855
        %965 = vmatpush.bf16.xpose.msra.mxu0 %v853
        %966 = vmatpush.bf16.xpose.msra.mxu0 %v851
        %967 = vmatpush.bf16.xpose.msra.mxu0 %v849
        %968 = vmatmul.bf16.gmra.mxu0 %v917
        %v969 = vpop.f32.mrf.mxu0
        %v970 = vadd.f32 %v956, %v969
        %v971 = vpop.f32.mrf.mxu0
        %v972 = vadd.f32 %v958, %v971
        %973 = vdwg.mxu0
        %v974 = vrcp.pop %v887
        %v975 = vrcp.pop %v913
        %v976 = vperm.slane %v974, 0
        %v977 = vperm.slane %v975, 0
        %v978 = vmul.f32 %v942, %v976
        %v979 = vmul.f32 %v970, %v977
        %v980 = vmul.f32 %v944, %v976
        %v981 = vmul.f32 %v972, %v977
        %v982 = vadd.f32 %v978, %v193
        %v983 = vadd.f32 %v979, %v194
        %v984 = vadd.f32 %v980, %v195
        %v985 = vadd.f32 %v981, %v196
        %986 = vst [vmem:[%s190] sm:$0xff] %v982
        %987 = vst [vmem:[%s190 + $0x8] sm:$0xff] %v983
        %988 = vst [vmem:[%s190 + $0x10] sm:$0xff] %v984
        %989 = vst [vmem:[%s190 + $0x18] sm:$0xff] %v985
        %s990 = sand.u32 %s96, 1
        %s991 = scalar_lea.sflag [#allocation4], %s990
        %s992 = sand.u32 %s96, 1
        %s993 = smul.addr %s992, 32
        %s994 = scalar_lea.vmem [#allocation5], %s993
        // Predicated region
        $region37: #{tpu_custom_call.1} parent=31 // pred_check
          %p995 = pneg %p106
        $region38: #{tpu_custom_call.1} parent=31 // pred_check_branch
          %997 = sbr.rel (%p995) target = $region40
        $region39: #{tpu_custom_call.1} parent=31 // pred_region
          %999 = vsyncadd %s991, 0
          %s1000 = smul.addr %s20, 4
          %s1001 = smul.addr %s1000, 8
          %s1002 = scalar_lea.hbm %s3, %s1001
          %s1003 = sshll.u32 %s994, 4
          %s1004 = int_to_ptr.vmem [resolvable:$true] %s1003
          %s1005 = sshll.u32 %s1002, 4
          %s1006 = int_to_ptr.hbm [resolvable:$true] %s1005
          %1011 = dma.vmem_to_hbm [thread:$0]  %s1004, 512, %s1006, %s991, 256, 256, 16
        $region40: #{tpu_custom_call.1} parent=31 // pred_fallthru
          _
      $region32: #{tpu_custom_call.1} parent=5 // pred_fallthru
        _
      %p1012 = scmp.le.s32.totalorder 2, %s15
      // Predicated region
      $region41: #{tpu_custom_call.1} parent=5 // pred_check
        %p1013 = pneg %p1012
      $region42: #{tpu_custom_call.1} parent=5 // pred_check_branch
        %1015 = sbr.rel (%p1013) target = $region44
      $region43: #{tpu_custom_call.1} parent=5 // pred_region
        %s1016 = ssub.s32 %s15, 2
        // Predicated region
        $region45: #{tpu_custom_call.1} parent=43 // pred_check
          %p1017 = pneg %p112
        $region46: #{tpu_custom_call.1} parent=43 // pred_check_branch
          %1019 = sbr.rel (%p1017) target = $region48
        $region47: #{tpu_custom_call.1} parent=43 // pred_region
          %s1020 = sand.u32 %s97, 1
          %s1021 = scalar_lea.sflag [#allocation4], %s1020
          %s1022 = sand.u32 %s97, 1
          %s1023 = smul.addr %s1022, 32
          %s1024 = scalar_lea.vmem [#allocation5], %s1023
          %1026 = dma.done %s1021, 512
        $region48: #{tpu_custom_call.1} parent=43 // pred_fallthru
          _
      $region44: #{tpu_custom_call.1} parent=5 // pred_fallthru
        _
    $region6: #{tpu_custom_call.1} parent=1 // loop_footer
      %s19 = sadd.s32 1, %s15
    $region7: #{tpu_custom_call.1} parent=1 // loop_footer_branch
      %14 = sbr.rel target = $region3
    $region8: #{tpu_custom_call.1} parent=1 // loop_exit
      _
    %1027 = vsyncpa [#allocation3], 1
    %s1028 = scalar_lea.sflag [#allocation3], 1
    %1029 = vsyncpa %s1028, 1
    %1030 = vsyncpa [#allocation4], 1
    %s1031 = scalar_lea.sflag [#allocation4], 1
    %1032 = vsyncpa %s1031, 1

</llo_original>
